<compile_context>
chip_gen: v5e
topology: v5e:2x2
jax: 0.10.0
libtpu: 0.0.40
codegen_flags: <defaults>
</compile_context>

<pallas_src>
import functools

import jax
import jax.numpy as jnp
from jax.experimental import pallas as pl
from jax.experimental.pallas import tpu as pltpu


# ------------------------------ fused kernel --------------------------------

def _autoencoder_kernel(x_ref, w1_ref, b1_ref, w2_ref, b2_ref,
                        wt1_ref, bt1_ref, wt2_ref, bt2_ref, o_ref, *, L):
    f32 = jnp.float32
    x = x_ref[...]                                   # (bt, 4, L), NCW block
    bt = x.shape[0]

    # ---- hoisted per-lane masks (reused everywhere; no re-broadcast per op).
    pos = jax.lax.broadcasted_iota(jnp.int32, (1, 1, L), 2)
    ok_l1 = pos >= 1            # lane l-1 exists within the sequence
    ok_r1 = pos < L - 1         # lane l+1 exists
    ok_l2 = pos >= 2            # lane l-2 exists (stride-2 stage)
    ok_r2 = pos < L - 2         # lane l+2 exists (stride-2 stage)
    even2 = (pos % 2) == 0
    even4 = (pos % 4) == 0

    def roll(v, s):
        """jnp.roll-style lane rotation (lane l gets v[l - s]) via the XLU."""
        return pltpu.roll(v, s % L, 2)

    def bmm(w, v):
        """(O, C) weight applied per batch slab: (bt, C, L) -> (bt, O, L)."""
        wb = jnp.broadcast_to(w, (bt,) + w.shape)
        return jax.lax.dot_general(
            wb, v, dimension_numbers=(((2,), (1,)), ((0,), (0,))),
            preferred_element_type=f32)

    # ---- conv1 (Conv1d 4->16, k=3, pad=1) + ReLU: three accumulating dots.
    # TODO(synk): on v7x these partial sums could accumulate in-place in the
    # MXU result buffer (MRB); there is no Pallas-level handle, Mosaic decides.
    h1 = (bmm(w1_ref[0], jnp.where(ok_l1, roll(x, 1), 0.0))
          + bmm(w1_ref[1], x)
          + bmm(w1_ref[2], jnp.where(ok_r1, roll(x, -1), 0.0))
          + b1_ref[...])
    h1 = jnp.maximum(h1, 0.0)                        # (bt, 16, L)

    # ---- MaxPool1d(2,2): pooled sample j lives at lane 2j; odd lanes become
    # junk that (by construction below) never feeds a valid lane again.
    p1 = jnp.maximum(h1, roll(h1, -1))               # valid @ lane % 2 == 0

    # ---- conv2 (Conv1d 16->4, k=3, pad=1) on the stride-2 lanes + ReLU.
    # Neighbours are 2 lanes away; three accumulating dots (no 48-row concat).
    h2 = (bmm(w2_ref[0], jnp.where(ok_l2, roll(p1, 2), 0.0))
          + bmm(w2_ref[1], p1)
          + bmm(w2_ref[2], jnp.where(ok_r2, roll(p1, -2), 0.0))
          + b2_ref[...])
    h2 = jnp.maximum(h2, 0.0)                        # (bt, 4, L), valid @ %2==0

    # ---- MaxPool1d(2,2): valid samples now at lanes with pos % 4 == 0.
    p2 = jnp.maximum(h2, roll(h2, -2))               # valid @ lane % 4 == 0

    # ---- t_conv1 (ConvTranspose1d 4->16, k=2, s=2) + ReLU.
    # Both taps in ONE stacked (32,4) matmul; halves are 16-row tile-aligned
    # slices.  Decoder sample 2m+k (length L/2 sequence) lands at lane 4m+2k.
    t_both = bmm(wt1_ref[...], p2)                   # (bt, 32, L)
    y0 = jnp.maximum(t_both[:, 0:16, :] + bt1_ref[...], 0.0)
    y1 = jnp.maximum(t_both[:, 16:32, :] + bt1_ref[...], 0.0)
    t1 = jnp.where(even4, y0, roll(y1, 2))           # (bt, 16, L), valid @ %2==0

    # ---- t_conv2 (ConvTranspose1d 16->4, k=2, s=2) + Sigmoid.
    # Single stacked matmul: weight is zero-padded to (16,16) so tap0 lives in
    # rows 0:4 and tap1 in rows 8:12 — both slices start on an 8-sublane tile
    # boundary (no misaligned sublane slice).  t1 streams through the MXU once.
    zt = bmm(wt2_ref[...], t1)                       # (bt, 16, L)
    z0 = zt[:, 0:4, :] + bt2_ref[...]                # tap 0 -> even lanes
    z1 = zt[:, 8:12, :] + bt2_ref[...]               # tap 1 -> odd lanes
    z = jnp.where(even2, z0, roll(z1, 1))            # (bt, 4, L), dense output
    # Sigmoid with the reciprocal on the EUP slot (approx) instead of VPU div.
    o_ref[...] = pl.reciprocal(1.0 + jnp.exp(-z), approx=True).astype(o_ref.dtype)


# ------------------------------ pallas wrapper -------------------------------

def _pick_batch_tile(n, l, target_lanes=32768):
    """Largest divisor of n with bt*l <= target_lanes lanes per grid step.

    Keeps at least 2 grid steps when n >= 2 so dimension_semantics=("parallel",)
    can shard across the two TensorCores of a v7x chip.  Every block holds whole
    length-L sequences (required: pltpu.roll wraps inside the block).
    """
    cap = max(1, min(n, target_lanes // max(l, 1)))
    if n >= 2:
        cap = min(cap, max(1, n // 2))
    for bt in range(cap, 0, -1):
        if n % bt == 0:
            return bt
    return 1


@jax.jit
def conv_autoencoder_forward(x_ncl, params):
    """x_ncl: (N, 4, L) float32, PyTorch NCW layout. Returns (N, 4, L)."""
    N, Cin, L = x_ncl.shape
    assert Cin == 4 and L % 4 == 0, "need 4 input channels and L divisible by 4"
    x = x_ncl.astype(jnp.float32)

    # Re-pack the tiny PyTorch weights (cheap, done on the host side of jit;
    # activations are NOT touched outside the kernel).
    w1 = jnp.transpose(params["conv1_w"], (2, 0, 1)).astype(jnp.float32)       # (3,16,4)
    b1 = params["conv1_b"].reshape(16, 1).astype(jnp.float32)
    w2 = jnp.transpose(params["conv2_w"], (2, 0, 1)).astype(jnp.float32)       # (3,4,16)
    b2 = params["conv2_b"].reshape(4, 1).astype(jnp.float32)
    wt1 = jnp.transpose(params["t_conv1_w"], (2, 1, 0)).reshape(32, 4).astype(jnp.float32)
    bt1 = params["t_conv1_b"].reshape(16, 1).astype(jnp.float32)
    wt2_taps = jnp.transpose(params["t_conv2_w"], (2, 1, 0)).astype(jnp.float32)  # (2,4,16)
    wt2 = jnp.zeros((16, 16), jnp.float32)
    wt2 = wt2.at[0:4].set(wt2_taps[0]).at[8:12].set(wt2_taps[1])               # tile-aligned taps
    bt2 = params["t_conv2_b"].reshape(4, 1).astype(jnp.float32)

    bt = _pick_batch_tile(N, L)
    rep2 = lambda i: (0, 0)            # weights / biases: same block every step
    rep3 = lambda i: (0, 0, 0)

    y = pl.pallas_call(
        functools.partial(_autoencoder_kernel, L=L),
        out_shape=jax.ShapeDtypeStruct((N, 4, L), jnp.float32),
        grid=(N // bt,),
        in_specs=[
            pl.BlockSpec((bt, 4, L), lambda i: (i, 0, 0)),   # x, native NCW block
            pl.BlockSpec((3, 16, 4), rep3),                  # conv1 taps
            pl.BlockSpec((16, 1), rep2),
            pl.BlockSpec((3, 4, 16), rep3),                  # conv2 taps
            pl.BlockSpec((4, 1), rep2),
            pl.BlockSpec((32, 4), rep2),                     # t_conv1 (stacked taps)
            pl.BlockSpec((16, 1), rep2),
            pl.BlockSpec((16, 16), rep2),                    # t_conv2 (stacked, padded)
            pl.BlockSpec((4, 1), rep2),
        ],
        out_specs=pl.BlockSpec((bt, 4, L), lambda i: (i, 0, 0)),
        compiler_params=pltpu.CompilerParams(
            dimension_semantics=("parallel",),
            vmem_limit_bytes=48 * 1024 * 1024),
    )(x, w1, b1, w2, b2, wt1, bt1, wt2, bt2)
    return y


# ----------------------------- params + reference ---------------------------

def init_params(key):
    ks = jax.random.split(key, 8)

    def u(k, shape, fan_in):
        bound = 1.0 / (fan_in ** 0.5)
        return jax.random.uniform(k, shape, jnp.float32, -bound, bound)

    return {
        "conv1_w":   u(ks[0], (16, 4, 3), 4 * 3),
        "conv1_b":   u(ks[1], (16,), 4 * 3),
        "conv2_w":   u(ks[2], (4, 16, 3), 16 * 3),
        "conv2_b":   u(ks[3], (4,), 16 * 3),
        "t_conv1_w": u(ks[4], (4, 16, 2), 16 * 2),
        "t_conv1_b": u(ks[5], (16,), 16 * 2),
        "t_conv2_w": u(ks[6], (16, 4, 2), 4 * 2),
        "t_conv2_b": u(ks[7], (4,), 4 * 2),
    }


def ref_forward(x, params):
    """Pure-JAX reference mirroring PyTorch semantics (NCW layout)."""
    def conv1d(x, W, b):                       # W: (Cout, Cin, K), pad=1
        N, Cin, L = x.shape
        K = W.shape[2]
        xp = jnp.pad(x, ((0, 0), (0, 0), (1, 1)))
        cols = jnp.stack([xp[:, :, k:k + L] for k in range(K)], axis=-1)
        return jnp.einsum("nclk,ock->nol", cols, W) + b[None, :, None]

    def maxpool2(x):
        N, C, L = x.shape
        return x.reshape(N, C, L // 2, 2).max(axis=-1)

    def tconv(x, W, b):                        # W: (Cin, Cout, K), stride=K=2
        N, Cin, L = x.shape
        Cout, K = W.shape[1], W.shape[2]
        y = jnp.einsum("ncl,cok->nolk", x, W).reshape(N, Cout, L * K)
        return y + b[None, :, None]

    h = jax.nn.relu(conv1d(x, params["conv1_w"], params["conv1_b"]))
    h = maxpool2(h)
    h = jax.nn.relu(conv1d(h, params["conv2_w"], params["conv2_b"]))
    h = maxpool2(h)
    h = jax.nn.relu(tconv(h, params["t_conv1_w"], params["t_conv1_b"]))
    return jax.nn.sigmoid(tconv(h, params["t_conv2_w"], params["t_conv2_b"]))


if __name__ == "__main__":
    key = jax.random.PRNGKey(0)
    kp, kx = jax.random.split(key)
    params = init_params(kp)

    # (batch=2, channels=4, seq=128) — Conv1d input, NCW layout (128 keeps the
    # lane axis of every block a full native 128-lane multiple).
    x = jax.random.uniform(kx, (2, 4, 128), jnp.float32)

    y = conv_autoencoder_forward(x, params)
    y = jax.block_until_ready(y)

    y_ref = ref_forward(x, params)
    assert y.shape == x.shape, y.shape
    # Tolerance relaxed vs. 1e-5 because the sigmoid uses the EUP approximate
    # reciprocal; everything else is exact f32, so real bugs would be O(0.1+).
    err = float(jnp.max(jnp.abs(y - y_ref)))
    assert jnp.allclose(y, y_ref, atol=5e-3, rtol=1e-3), err
    print("KERNEL_OK")
</pallas_src>

<mosaic_0001>
module attributes {stable_mosaic.version = 11 : i64} {
  func.func @_autoencoder_kernel(%arg0: i32, %arg1: memref<1x4x128xf32, #tpu.memory_space<vmem>>, %arg2: memref<3x16x4xf32, #tpu.memory_space<vmem>>, %arg3: memref<16x1xf32, #tpu.memory_space<vmem>>, %arg4: memref<3x4x16xf32, #tpu.memory_space<vmem>>, %arg5: memref<4x1xf32, #tpu.memory_space<vmem>>, %arg6: memref<32x4xf32, #tpu.memory_space<vmem>>, %arg7: memref<16x1xf32, #tpu.memory_space<vmem>>, %arg8: memref<16x16xf32, #tpu.memory_space<vmem>>, %arg9: memref<4x1xf32, #tpu.memory_space<vmem>>, %arg10: memref<1x4x128xf32, #tpu.memory_space<vmem>>) attributes {dimension_semantics = [#tpu.dimension_semantics<parallel>], iteration_bounds = array<i64: 2>, scalar_prefetch = 0 : i64, scratch_operands = 0 : i64, tpu.core_type = #tpu.core_type<tc>, window_params = [{transform_indices = @transform_0, window_bounds = array<i64: 1, 4, 128>}, {pipeline_mode = #tpu.pipeline_mode<synchronous>, transform_indices = @transform_1, window_bounds = array<i64: 3, 16, 4>}, {pipeline_mode = #tpu.pipeline_mode<synchronous>, transform_indices = @transform_2, window_bounds = array<i64: 16, 1>}, {pipeline_mode = #tpu.pipeline_mode<synchronous>, transform_indices = @transform_3, window_bounds = array<i64: 3, 4, 16>}, {pipeline_mode = #tpu.pipeline_mode<synchronous>, transform_indices = @transform_4, window_bounds = array<i64: 4, 1>}, {pipeline_mode = #tpu.pipeline_mode<synchronous>, transform_indices = @transform_5, window_bounds = array<i64: 32, 4>}, {pipeline_mode = #tpu.pipeline_mode<synchronous>, transform_indices = @transform_6, window_bounds = array<i64: 16, 1>}, {pipeline_mode = #tpu.pipeline_mode<synchronous>, transform_indices = @transform_7, window_bounds = array<i64: 16, 16>}, {pipeline_mode = #tpu.pipeline_mode<synchronous>, transform_indices = @transform_8, window_bounds = array<i64: 4, 1>}, {transform_indices = @transform_9, window_bounds = array<i64: 1, 4, 128>}]} {
    %c0 = arith.constant 0 : index
    %c0_0 = arith.constant 0 : index
    %c0_1 = arith.constant 0 : index
    %0 = vector.load %arg1[%c0, %c0_0, %c0_1] : memref<1x4x128xf32, #tpu.memory_space<vmem>>, vector<1x4x128xf32>
    %1 = tpu.iota {dimensions = array<i32: 2>} : vector<1x1x128xi32>
    %c1_i32 = arith.constant 1 : i32
    %2 = vector.broadcast %c1_i32 : i32 to vector<1x1x128xi32>
    %3 = arith.cmpi sge, %1, %2 : vector<1x1x128xi32>
    %c127_i32 = arith.constant 127 : i32
    %4 = vector.broadcast %c127_i32 : i32 to vector<1x1x128xi32>
    %5 = arith.cmpi slt, %1, %4 : vector<1x1x128xi32>
    %c2_i32 = arith.constant 2 : i32
    %6 = vector.broadcast %c2_i32 : i32 to vector<1x1x128xi32>
    %7 = arith.cmpi sge, %1, %6 : vector<1x1x128xi32>
    %c126_i32 = arith.constant 126 : i32
    %8 = vector.broadcast %c126_i32 : i32 to vector<1x1x128xi32>
    %9 = arith.cmpi slt, %1, %8 : vector<1x1x128xi32>
    %c2_i32_2 = arith.constant 2 : i32
    %c0_i32 = arith.constant 0 : i32
    %10 = arith.cmpi eq, %c2_i32_2, %c0_i32 : i32
    %c1_i32_3 = arith.constant 1 : i32
    %11 = arith.select %10, %c1_i32_3, %c2_i32_2 : i32
    %12 = vector.broadcast %11 : i32 to vector<1x1x128xi32>
    %13 = arith.remsi %1, %12 : vector<1x1x128xi32>
    %c0_i32_4 = arith.constant 0 : i32
    %14 = vector.broadcast %c0_i32_4 : i32 to vector<1x1x128xi32>
    %15 = arith.cmpi ne, %13, %14 : vector<1x1x128xi32>
    %c0_i32_5 = arith.constant 0 : i32
    %16 = vector.broadcast %c0_i32_5 : i32 to vector<1x1x128xi32>
    %17 = arith.cmpi slt, %13, %16 : vector<1x1x128xi32>
    %c0_i32_6 = arith.constant 0 : i32
    %18 = arith.cmpi slt, %11, %c0_i32_6 : i32
    %19 = vector.broadcast %18 : i1 to vector<1x1x128xi1>
    %20 = vector.broadcast %19 : vector<1x1x128xi1> to vector<1x1x128xi1>
    %21 = arith.xori %17, %20 : vector<1x1x128xi1>
    %22 = arith.andi %21, %15 : vector<1x1x128xi1>
    %23 = vector.broadcast %11 : i32 to vector<1x1x128xi32>
    %24 = arith.addi %13, %23 : vector<1x1x128xi32>
    %25 = arith.select %22, %24, %13 : vector<1x1x128xi1>, vector<1x1x128xi32>
    %c0_i32_7 = arith.constant 0 : i32
    %26 = vector.broadcast %c0_i32_7 : i32 to vector<1x1x128xi32>
    %27 = arith.cmpi eq, %25, %26 : vector<1x1x128xi32>
    %c4_i32 = arith.constant 4 : i32
    %c0_i32_8 = arith.constant 0 : i32
    %28 = arith.cmpi eq, %c4_i32, %c0_i32_8 : i32
    %c1_i32_9 = arith.constant 1 : i32
    %29 = arith.select %28, %c1_i32_9, %c4_i32 : i32
    %30 = vector.broadcast %29 : i32 to vector<1x1x128xi32>
    %31 = arith.remsi %1, %30 : vector<1x1x128xi32>
    %c0_i32_10 = arith.constant 0 : i32
    %32 = vector.broadcast %c0_i32_10 : i32 to vector<1x1x128xi32>
    %33 = arith.cmpi ne, %31, %32 : vector<1x1x128xi32>
    %c0_i32_11 = arith.constant 0 : i32
    %34 = vector.broadcast %c0_i32_11 : i32 to vector<1x1x128xi32>
    %35 = arith.cmpi slt, %31, %34 : vector<1x1x128xi32>
    %c0_i32_12 = arith.constant 0 : i32
    %36 = arith.cmpi slt, %29, %c0_i32_12 : i32
    %37 = vector.broadcast %36 : i1 to vector<1x1x128xi1>
    %38 = vector.broadcast %37 : vector<1x1x128xi1> to vector<1x1x128xi1>
    %39 = arith.xori %35, %38 : vector<1x1x128xi1>
    %40 = arith.andi %39, %33 : vector<1x1x128xi1>
    %41 = vector.broadcast %29 : i32 to vector<1x1x128xi32>
    %42 = arith.addi %31, %41 : vector<1x1x128xi32>
    %43 = arith.select %40, %42, %31 : vector<1x1x128xi1>, vector<1x1x128xi32>
    %c0_i32_13 = arith.constant 0 : i32
    %44 = vector.broadcast %c0_i32_13 : i32 to vector<1x1x128xi32>
    %45 = arith.cmpi eq, %43, %44 : vector<1x1x128xi32>
    %c0_14 = arith.constant 0 : index
    %c0_15 = arith.constant 0 : index
    %c0_16 = arith.constant 0 : index
    %46 = vector.load %arg2[%c0_14, %c0_15, %c0_16] : memref<3x16x4xf32, #tpu.memory_space<vmem>>, vector<1x16x4xf32>
    %47 = vector.shape_cast %46 : vector<1x16x4xf32> to vector<16x4xf32>
    %c1_i32_17 = arith.constant 1 : i32
    %48 = tpu.dynamic_rotate %0 by %c1_i32_17 dim 2 : vector<1x4x128xf32>, i32 -> vector<1x4x128xf32>
    %cst = arith.constant 0.000000e+00 : f32
    %49 = vector.shape_cast %3 : vector<1x1x128xi1> to vector<1x1x128xi1>
    %50 = vector.broadcast %49 : vector<1x1x128xi1> to vector<1x4x128xi1>
    %51 = vector.broadcast %cst : f32 to vector<1x4x128xf32>
    %52 = arith.select %50, %48, %51 : vector<1x4x128xi1>, vector<1x4x128xf32>
    %53 = vector.shape_cast %47 : vector<16x4xf32> to vector<1x16x4xf32>
    %cst_18 = arith.constant dense<0.000000e+00> : vector<1x16x128xf32>
    %54 = tpu.matmul %53, %52, %cst_18 {dimension_numbers = #tpu.dot_dimension_numbers<[2], [1], [1], [2], [0, 0, 0, 1, 1, 2], [0], [0]>} : vector<1x16x4xf32>, vector<1x4x128xf32>, vector<1x16x128xf32> -> vector<1x16x128xf32>
    %c1 = arith.constant 1 : index
    %c0_19 = arith.constant 0 : index
    %c0_20 = arith.constant 0 : index
    %55 = vector.load %arg2[%c1, %c0_19, %c0_20] : memref<3x16x4xf32, #tpu.memory_space<vmem>>, vector<1x16x4xf32>
    %56 = vector.shape_cast %55 : vector<1x16x4xf32> to vector<16x4xf32>
    %57 = vector.shape_cast %56 : vector<16x4xf32> to vector<1x16x4xf32>
    %cst_21 = arith.constant dense<0.000000e+00> : vector<1x16x128xf32>
    %58 = tpu.matmul %57, %0, %cst_21 {dimension_numbers = #tpu.dot_dimension_numbers<[2], [1], [1], [2], [0, 0, 0, 1, 1, 2], [0], [0]>} : vector<1x16x4xf32>, vector<1x4x128xf32>, vector<1x16x128xf32> -> vector<1x16x128xf32>
    %59 = arith.addf %54, %58 : vector<1x16x128xf32>
    %c2 = arith.constant 2 : index
    %c0_22 = arith.constant 0 : index
    %c0_23 = arith.constant 0 : index
    %60 = vector.load %arg2[%c2, %c0_22, %c0_23] : memref<3x16x4xf32, #tpu.memory_space<vmem>>, vector<1x16x4xf32>
    %61 = vector.shape_cast %60 : vector<1x16x4xf32> to vector<16x4xf32>
    %c127_i32_24 = arith.constant 127 : i32
    %62 = tpu.dynamic_rotate %0 by %c127_i32_24 dim 2 : vector<1x4x128xf32>, i32 -> vector<1x4x128xf32>
    %cst_25 = arith.constant 0.000000e+00 : f32
    %63 = vector.shape_cast %5 : vector<1x1x128xi1> to vector<1x1x128xi1>
    %64 = vector.broadcast %63 : vector<1x1x128xi1> to vector<1x4x128xi1>
    %65 = vector.broadcast %cst_25 : f32 to vector<1x4x128xf32>
    %66 = arith.select %64, %62, %65 : vector<1x4x128xi1>, vector<1x4x128xf32>
    %67 = vector.shape_cast %61 : vector<16x4xf32> to vector<1x16x4xf32>
    %cst_26 = arith.constant dense<0.000000e+00> : vector<1x16x128xf32>
    %68 = tpu.matmul %67, %66, %cst_26 {dimension_numbers = #tpu.dot_dimension_numbers<[2], [1], [1], [2], [0, 0, 0, 1, 1, 2], [0], [0]>} : vector<1x16x4xf32>, vector<1x4x128xf32>, vector<1x16x128xf32> -> vector<1x16x128xf32>
    %69 = arith.addf %59, %68 : vector<1x16x128xf32>
    %c0_27 = arith.constant 0 : index
    %c0_28 = arith.constant 0 : index
    %70 = vector.load %arg3[%c0_27, %c0_28] : memref<16x1xf32, #tpu.memory_space<vmem>>, vector<16x1xf32>
    %71 = vector.shape_cast %70 : vector<16x1xf32> to vector<1x16x1xf32>
    %72 = vector.broadcast %71 : vector<1x16x1xf32> to vector<1x16x128xf32>
    %73 = arith.addf %69, %72 : vector<1x16x128xf32>
    %cst_29 = arith.constant 0.000000e+00 : f32
    %74 = vector.broadcast %cst_29 : f32 to vector<1x16x128xf32>
    %75 = arith.maximumf %73, %74 : vector<1x16x128xf32>
    %c127_i32_30 = arith.constant 127 : i32
    %76 = tpu.dynamic_rotate %75 by %c127_i32_30 dim 2 : vector<1x16x128xf32>, i32 -> vector<1x16x128xf32>
    %77 = arith.maximumf %75, %76 : vector<1x16x128xf32>
    %c0_31 = arith.constant 0 : index
    %c0_32 = arith.constant 0 : index
    %c0_33 = arith.constant 0 : index
    %78 = vector.load %arg4[%c0_31, %c0_32, %c0_33] : memref<3x4x16xf32, #tpu.memory_space<vmem>>, vector<1x4x16xf32>
    %79 = vector.shape_cast %78 : vector<1x4x16xf32> to vector<4x16xf32>
    %c2_i32_34 = arith.constant 2 : i32
    %80 = tpu.dynamic_rotate %77 by %c2_i32_34 dim 2 : vector<1x16x128xf32>, i32 -> vector<1x16x128xf32>
    %cst_35 = arith.constant 0.000000e+00 : f32
    %81 = vector.shape_cast %7 : vector<1x1x128xi1> to vector<1x1x128xi1>
    %82 = vector.broadcast %81 : vector<1x1x128xi1> to vector<1x16x128xi1>
    %83 = vector.broadcast %cst_35 : f32 to vector<1x16x128xf32>
    %84 = arith.select %82, %80, %83 : vector<1x16x128xi1>, vector<1x16x128xf32>
    %85 = vector.shape_cast %79 : vector<4x16xf32> to vector<1x4x16xf32>
    %cst_36 = arith.constant dense<0.000000e+00> : vector<1x4x128xf32>
    %86 = tpu.matmul %85, %84, %cst_36 {dimension_numbers = #tpu.dot_dimension_numbers<[2], [1], [1], [2], [0, 0, 0, 1, 1, 2], [0], [0]>} : vector<1x4x16xf32>, vector<1x16x128xf32>, vector<1x4x128xf32> -> vector<1x4x128xf32>
    %c1_37 = arith.constant 1 : index
    %c0_38 = arith.constant 0 : index
    %c0_39 = arith.constant 0 : index
    %87 = vector.load %arg4[%c1_37, %c0_38, %c0_39] : memref<3x4x16xf32, #tpu.memory_space<vmem>>, vector<1x4x16xf32>
    %88 = vector.shape_cast %87 : vector<1x4x16xf32> to vector<4x16xf32>
    %89 = vector.shape_cast %88 : vector<4x16xf32> to vector<1x4x16xf32>
    %cst_40 = arith.constant dense<0.000000e+00> : vector<1x4x128xf32>
    %90 = tpu.matmul %89, %77, %cst_40 {dimension_numbers = #tpu.dot_dimension_numbers<[2], [1], [1], [2], [0, 0, 0, 1, 1, 2], [0], [0]>} : vector<1x4x16xf32>, vector<1x16x128xf32>, vector<1x4x128xf32> -> vector<1x4x128xf32>
    %91 = arith.addf %86, %90 : vector<1x4x128xf32>
    %c2_41 = arith.constant 2 : index
    %c0_42 = arith.constant 0 : index
    %c0_43 = arith.constant 0 : index
    %92 = vector.load %arg4[%c2_41, %c0_42, %c0_43] : memref<3x4x16xf32, #tpu.memory_space<vmem>>, vector<1x4x16xf32>
    %93 = vector.shape_cast %92 : vector<1x4x16xf32> to vector<4x16xf32>
    %c126_i32_44 = arith.constant 126 : i32
    %94 = tpu.dynamic_rotate %77 by %c126_i32_44 dim 2 : vector<1x16x128xf32>, i32 -> vector<1x16x128xf32>
    %cst_45 = arith.constant 0.000000e+00 : f32
    %95 = vector.shape_cast %9 : vector<1x1x128xi1> to vector<1x1x128xi1>
    %96 = vector.broadcast %95 : vector<1x1x128xi1> to vector<1x16x128xi1>
    %97 = vector.broadcast %cst_45 : f32 to vector<1x16x128xf32>
    %98 = arith.select %96, %94, %97 : vector<1x16x128xi1>, vector<1x16x128xf32>
    %99 = vector.shape_cast %93 : vector<4x16xf32> to vector<1x4x16xf32>
    %cst_46 = arith.constant dense<0.000000e+00> : vector<1x4x128xf32>
    %100 = tpu.matmul %99, %98, %cst_46 {dimension_numbers = #tpu.dot_dimension_numbers<[2], [1], [1], [2], [0, 0, 0, 1, 1, 2], [0], [0]>} : vector<1x4x16xf32>, vector<1x16x128xf32>, vector<1x4x128xf32> -> vector<1x4x128xf32>
    %101 = arith.addf %91, %100 : vector<1x4x128xf32>
    %c0_47 = arith.constant 0 : index
    %c0_48 = arith.constant 0 : index
    %102 = vector.load %arg5[%c0_47, %c0_48] : memref<4x1xf32, #tpu.memory_space<vmem>>, vector<4x1xf32>
    %103 = vector.shape_cast %102 : vector<4x1xf32> to vector<1x4x1xf32>
    %104 = vector.broadcast %103 : vector<1x4x1xf32> to vector<1x4x128xf32>
    %105 = arith.addf %101, %104 : vector<1x4x128xf32>
    %cst_49 = arith.constant 0.000000e+00 : f32
    %106 = vector.broadcast %cst_49 : f32 to vector<1x4x128xf32>
    %107 = arith.maximumf %105, %106 : vector<1x4x128xf32>
    %c126_i32_50 = arith.constant 126 : i32
    %108 = tpu.dynamic_rotate %107 by %c126_i32_50 dim 2 : vector<1x4x128xf32>, i32 -> vector<1x4x128xf32>
    %109 = arith.maximumf %107, %108 : vector<1x4x128xf32>
    %c0_51 = arith.constant 0 : index
    %c0_52 = arith.constant 0 : index
    %110 = vector.load %arg6[%c0_51, %c0_52] : memref<32x4xf32, #tpu.memory_space<vmem>>, vector<32x4xf32>
    %111 = vector.shape_cast %110 : vector<32x4xf32> to vector<1x32x4xf32>
    %cst_53 = arith.constant dense<0.000000e+00> : vector<1x32x128xf32>
    %112 = tpu.matmul %111, %109, %cst_53 {dimension_numbers = #tpu.dot_dimension_numbers<[2], [1], [1], [2], [0, 0, 0, 1, 1, 2], [0], [0]>} : vector<1x32x4xf32>, vector<1x4x128xf32>, vector<1x32x128xf32> -> vector<1x32x128xf32>
    %113 = vector.extract_strided_slice %112 {offsets = [0, 0, 0], sizes = [1, 16, 128], strides = [1, 1, 1]} : vector<1x32x128xf32> to vector<1x16x128xf32>
    %c0_54 = arith.constant 0 : index
    %c0_55 = arith.constant 0 : index
    %114 = vector.load %arg7[%c0_54, %c0_55] : memref<16x1xf32, #tpu.memory_space<vmem>>, vector<16x1xf32>
    %115 = vector.shape_cast %114 : vector<16x1xf32> to vector<1x16x1xf32>
    %116 = vector.broadcast %115 : vector<1x16x1xf32> to vector<1x16x128xf32>
    %117 = arith.addf %113, %116 : vector<1x16x128xf32>
    %cst_56 = arith.constant 0.000000e+00 : f32
    %118 = vector.broadcast %cst_56 : f32 to vector<1x16x128xf32>
    %119 = arith.maximumf %117, %118 : vector<1x16x128xf32>
    %120 = vector.extract_strided_slice %112 {offsets = [0, 16, 0], sizes = [1, 16, 128], strides = [1, 1, 1]} : vector<1x32x128xf32> to vector<1x16x128xf32>
    %c0_57 = arith.constant 0 : index
    %c0_58 = arith.constant 0 : index
    %121 = vector.load %arg7[%c0_57, %c0_58] : memref<16x1xf32, #tpu.memory_space<vmem>>, vector<16x1xf32>
    %122 = vector.shape_cast %121 : vector<16x1xf32> to vector<1x16x1xf32>
    %123 = vector.broadcast %122 : vector<1x16x1xf32> to vector<1x16x128xf32>
    %124 = arith.addf %120, %123 : vector<1x16x128xf32>
    %cst_59 = arith.constant 0.000000e+00 : f32
    %125 = vector.broadcast %cst_59 : f32 to vector<1x16x128xf32>
    %126 = arith.maximumf %124, %125 : vector<1x16x128xf32>
    %c2_i32_60 = arith.constant 2 : i32
    %127 = tpu.dynamic_rotate %126 by %c2_i32_60 dim 2 : vector<1x16x128xf32>, i32 -> vector<1x16x128xf32>
    %128 = vector.shape_cast %45 : vector<1x1x128xi1> to vector<1x1x128xi1>
    %129 = vector.broadcast %128 : vector<1x1x128xi1> to vector<1x16x128xi1>
    %130 = arith.select %129, %119, %127 : vector<1x16x128xi1>, vector<1x16x128xf32>
    %c0_61 = arith.constant 0 : index
    %c0_62 = arith.constant 0 : index
    %131 = vector.load %arg8[%c0_61, %c0_62] : memref<16x16xf32, #tpu.memory_space<vmem>>, vector<16x16xf32>
    %132 = vector.shape_cast %131 : vector<16x16xf32> to vector<1x16x16xf32>
    %cst_63 = arith.constant dense<0.000000e+00> : vector<1x16x128xf32>
    %133 = tpu.matmul %132, %130, %cst_63 {dimension_numbers = #tpu.dot_dimension_numbers<[2], [1], [1], [2], [0, 0, 0, 1, 1, 2], [0], [0]>} : vector<1x16x16xf32>, vector<1x16x128xf32>, vector<1x16x128xf32> -> vector<1x16x128xf32>
    %134 = vector.extract_strided_slice %133 {offsets = [0, 0, 0], sizes = [1, 4, 128], strides = [1, 1, 1]} : vector<1x16x128xf32> to vector<1x4x128xf32>
    %c0_64 = arith.constant 0 : index
    %c0_65 = arith.constant 0 : index
    %135 = vector.load %arg9[%c0_64, %c0_65] : memref<4x1xf32, #tpu.memory_space<vmem>>, vector<4x1xf32>
    %136 = vector.shape_cast %135 : vector<4x1xf32> to vector<1x4x1xf32>
    %137 = vector.broadcast %136 : vector<1x4x1xf32> to vector<1x4x128xf32>
    %138 = arith.addf %134, %137 : vector<1x4x128xf32>
    %139 = vector.extract_strided_slice %133 {offsets = [0, 8, 0], sizes = [1, 4, 128], strides = [1, 1, 1]} : vector<1x16x128xf32> to vector<1x4x128xf32>
    %c0_66 = arith.constant 0 : index
    %c0_67 = arith.constant 0 : index
    %140 = vector.load %arg9[%c0_66, %c0_67] : memref<4x1xf32, #tpu.memory_space<vmem>>, vector<4x1xf32>
    %141 = vector.shape_cast %140 : vector<4x1xf32> to vector<1x4x1xf32>
    %142 = vector.broadcast %141 : vector<1x4x1xf32> to vector<1x4x128xf32>
    %143 = arith.addf %139, %142 : vector<1x4x128xf32>
    %c1_i32_68 = arith.constant 1 : i32
    %144 = tpu.dynamic_rotate %143 by %c1_i32_68 dim 2 : vector<1x4x128xf32>, i32 -> vector<1x4x128xf32>
    %145 = vector.shape_cast %27 : vector<1x1x128xi1> to vector<1x1x128xi1>
    %146 = vector.broadcast %145 : vector<1x1x128xi1> to vector<1x4x128xi1>
    %147 = arith.select %146, %138, %144 : vector<1x4x128xi1>, vector<1x4x128xf32>
    %cst_69 = arith.constant 0.000000e+00 : f32
    %148 = vector.broadcast %cst_69 : f32 to vector<1x4x128xf32>
    %149 = arith.subf %148, %147 : vector<1x4x128xf32>
    %150 = math.exp %149 : vector<1x4x128xf32>
    %cst_70 = arith.constant 1.000000e+00 : f32
    %151 = vector.broadcast %cst_70 : f32 to vector<1x4x128xf32>
    %152 = arith.addf %151, %150 : vector<1x4x128xf32>
    %153 = tpu.reciprocal %152 {approx = true} : vector<1x4x128xf32> -> vector<1x4x128xf32>
    %c0_71 = arith.constant 0 : index
    %c0_72 = arith.constant 0 : index
    %c0_73 = arith.constant 0 : index
    %154 = vector.load %arg10[%c0_71, %c0_72, %c0_73] : memref<1x4x128xf32, #tpu.memory_space<vmem>>, vector<1x4x128xf32>
    tpu.vector_store %arg10[%c0_71, %c0_72, %c0_73], %153 {strides = array<i32>} : memref<1x4x128xf32, #tpu.memory_space<vmem>>, vector<1x4x128xf32>,
    return
  }
  func.func @transform_0(%arg0: i32) -> (i32, i32, i32) {
    %c0_i32 = arith.constant 0 : i32
    %c0_i32_0 = arith.constant 0 : i32
    %c0_i32_1 = arith.constant 0 : i32
    return %arg0, %c0_i32, %c0_i32_0 : i32, i32, i32
  }
  func.func @transform_1(%arg0: i32) -> (i32, i32, i32) {
    %c0_i32 = arith.constant 0 : i32
    %c0_i32_0 = arith.constant 0 : i32
    %c0_i32_1 = arith.constant 0 : i32
    %c0_i32_2 = arith.constant 0 : i32
    return %c0_i32, %c0_i32_0, %c0_i32_1 : i32, i32, i32
  }
  func.func @transform_2(%arg0: i32) -> (i32, i32) {
    %c0_i32 = arith.constant 0 : i32
    %c0_i32_0 = arith.constant 0 : i32
    %c0_i32_1 = arith.constant 0 : i32
    return %c0_i32, %c0_i32_0 : i32, i32
  }
  func.func @transform_3(%arg0: i32) -> (i32, i32, i32) {
    %c0_i32 = arith.constant 0 : i32
    %c0_i32_0 = arith.constant 0 : i32
    %c0_i32_1 = arith.constant 0 : i32
    %c0_i32_2 = arith.constant 0 : i32
    return %c0_i32, %c0_i32_0, %c0_i32_1 : i32, i32, i32
  }
  func.func @transform_4(%arg0: i32) -> (i32, i32) {
    %c0_i32 = arith.constant 0 : i32
    %c0_i32_0 = arith.constant 0 : i32
    %c0_i32_1 = arith.constant 0 : i32
    return %c0_i32, %c0_i32_0 : i32, i32
  }
  func.func @transform_5(%arg0: i32) -> (i32, i32) {
    %c0_i32 = arith.constant 0 : i32
    %c0_i32_0 = arith.constant 0 : i32
    %c0_i32_1 = arith.constant 0 : i32
    return %c0_i32, %c0_i32_0 : i32, i32
  }
  func.func @transform_6(%arg0: i32) -> (i32, i32) {
    %c0_i32 = arith.constant 0 : i32
    %c0_i32_0 = arith.constant 0 : i32
    %c0_i32_1 = arith.constant 0 : i32
    return %c0_i32, %c0_i32_0 : i32, i32
  }
  func.func @transform_7(%arg0: i32) -> (i32, i32) {
    %c0_i32 = arith.constant 0 : i32
    %c0_i32_0 = arith.constant 0 : i32
    %c0_i32_1 = arith.constant 0 : i32
    return %c0_i32, %c0_i32_0 : i32, i32
  }
  func.func @transform_8(%arg0: i32) -> (i32, i32) {
    %c0_i32 = arith.constant 0 : i32
    %c0_i32_0 = arith.constant 0 : i32
    %c0_i32_1 = arith.constant 0 : i32
    return %c0_i32, %c0_i32_0 : i32, i32
  }
  func.func @transform_9(%arg0: i32) -> (i32, i32, i32) {
    %c0_i32 = arith.constant 0 : i32
    %c0_i32_0 = arith.constant 0 : i32
    %c0_i32_1 = arith.constant 0 : i32
    return %arg0, %c0_i32, %c0_i32_0 : i32, i32, i32
  }
}

</mosaic_0001>

<llo_original>
// kernel: conv_autoencoder_forward.1
$region0: #{conv_autoencoder_forward.1}
  #allocation0 [shape = 'u32[]', space=smem, size = 0x4, offset = 0x4, fixed_abs, tag = 'smem constant byte address 0x4 - core index']
  #allocation1 [shape = 'u32[72,128]{1,0:T(1,128)}', space=vmem, size = 0x9000, scoped, tag = 'internal scratch']
  %s0 = inlined_call_operand.vmem [shape: f32[2,4,128], index: 0, kind: input, shape index: {}]
  %s1 = inlined_call_operand.vmem [shape: f32[3,16,4], index: 1, kind: input, shape index: {}]
  %s2 = inlined_call_operand.vmem [shape: f32[16,1], index: 2, kind: input, shape index: {}]
  %s3 = inlined_call_operand.vmem [shape: f32[3,4,16], index: 3, kind: input, shape index: {}]
  %s4 = inlined_call_operand.vmem [shape: f32[4,1], index: 4, kind: input, shape index: {}]
  %s5 = inlined_call_operand.vmem [shape: f32[32,4], index: 5, kind: input, shape index: {}]
  %s6 = inlined_call_operand.vmem [shape: f32[16,1], index: 6, kind: input, shape index: {}]
  %s7 = inlined_call_operand.vmem [shape: f32[16,16], index: 7, kind: input, shape index: {}]
  %s8 = inlined_call_operand.vmem [shape: f32[4,1], index: 8, kind: input, shape index: {}]
  %s9 = inlined_call_operand.hbm [shape: f32[2,4,128], index: 9, kind: output, shape index: {}]
  %s10 = sld [smem:[#allocation0]]
  $region69: #{conv_autoencoder_forward.1} parent=0
    _
  %s12 = ssub.s32 1, %s10
  %s13 = scalar_select 0, %s12, %s10
  $region1: #{conv_autoencoder_forward.1} parent=0
    #allocation2 [shape = 'u8[4096]{0}', space=vmem, size = 0x1000, scoped, tag = 'output window, operand 0']
    #allocation3 [shape = 's32[2]{0}', space=sflag, size = 0x8, scoped, tag = 'scoped memory for conv_autoencoder_forward.1']
    %14 = vsyncpa [#allocation3], 0
    %s15 = scalar_lea.sflag [#allocation3], 1
    %16 = vsyncpa %s15, 0
    loop: start=0, step=1, limit=4
    $region2: #{conv_autoencoder_forward.1} parent=1 // loop_pre_header
      _
    $region3: #{conv_autoencoder_forward.1} parent=1 // loop_header
      %s18 = sphi 0, %s22
      %p19 = scmp.ge.s32.totalorder %s18, 4
      %s28 = sphi 0, %s30
      %s31 = sphi 0, %s28
      %s32 = sphi 0, %s31
      %s48 = sphi 0, %s32
      %s52 = sphi 0, %s52
      %s54 = sphi 0, %s52
      %s55 = sphi 0, %s54
      %s69 = sphi 0, %s55
      %s73 = sphi 0, %s73
      %s75 = sphi 0, %s73
      %s76 = sphi 0, %s75
      %s90 = sphi 0, %s76
      %s94 = sphi 0, %s94
      %s96 = sphi 0, %s94
      %s97 = sphi 0, %s96
      %s111 = sphi 0, %s97
      %s115 = sphi 0, %s115
      %s117 = sphi 0, %s115
      %s118 = sphi 0, %s117
      %s132 = sphi 0, %s118
      %s136 = sphi 0, %s136
      %s138 = sphi 0, %s136
      %s139 = sphi 0, %s138
      %s153 = sphi 0, %s139
      %s157 = sphi 0, %s157
      %s159 = sphi 0, %s157
      %s160 = sphi 0, %s159
      %s174 = sphi 0, %s160
      %s178 = sphi 0, %s178
      %s180 = sphi 0, %s178
      %s181 = sphi 0, %s180
      %s195 = sphi 0, %s181
      %s199 = sphi 0, %s199
      %s201 = sphi 0, %s199
      %s202 = sphi 0, %s201
      %s216 = sphi 0, %s202
      %s222 = sphi 0, %s224
      %s225 = sphi 0, %s222
      %s226 = sphi 0, %s225
      %s242 = sphi 0, %s226
    $region4: #{conv_autoencoder_forward.1} parent=1 // loop_header_branch
      %21 = sbr.rel (%p19) target = $region8
    $region5: #{conv_autoencoder_forward.1} parent=1 // loop_body
      %s23 = ssub.s32 %s18, 1
      %s24 = ssub.s32 %s18, 2
      %s25 = sadd.s32 %s18, 1
      %s26 = ssub.s32 %s18, %s25
      %p27 = scmp.eq.s32.totalorder %s26, 0
      %s29 = sadd.s32 %s28, 1
      %s30 = scalar_select %p27, %s28, %s29
      %p33 = pneg %p27
      %p34 = scmp.eq.s32.totalorder %s18, 1
      %p35 = por %p33, %p34
      %p36 = scmp.ne.s32.totalorder %s28, %s31
      %p37 = scmp.eq.s32.totalorder %s18, 0
      %p38 = por %p36, %p37
      %p39 = scmp.ne.s32.totalorder %s28, %s31
      %p40 = scmp.eq.s32.totalorder %s23, 1
      %p41 = por %p39, %p40
      %p42 = scmp.ne.s32.totalorder %s31, %s32
      %p43 = scmp.eq.s32.totalorder %s23, 0
      %p44 = por %p42, %p43
      %p45 = scmp.ne.s32.totalorder %s31, %s32
      %p46 = scmp.eq.s32.totalorder %s24, 1
      %p47 = por %p45, %p46
      %p49 = scmp.ne.s32.totalorder %s32, %s48
      %p50 = scmp.eq.s32.totalorder %s24, 0
      %p51 = por %p49, %p50
      %s53 = sadd.s32 %s52, 1
      %p56 = scmp.eq.s32.totalorder %s18, 1
      %p57 = scmp.ne.s32.totalorder %s52, %s54
      %p58 = scmp.eq.s32.totalorder %s18, 0
      %p59 = por %p57, %p58
      %p60 = scmp.ne.s32.totalorder %s52, %s54
      %p61 = scmp.eq.s32.totalorder %s23, 1
      %p62 = por %p60, %p61
      %p63 = scmp.ne.s32.totalorder %s54, %s55
      %p64 = scmp.eq.s32.totalorder %s23, 0
      %p65 = por %p63, %p64
      %p66 = scmp.ne.s32.totalorder %s54, %s55
      %p67 = scmp.eq.s32.totalorder %s24, 1
      %p68 = por %p66, %p67
      %p70 = scmp.ne.s32.totalorder %s55, %s69
      %p71 = scmp.eq.s32.totalorder %s24, 0
      %p72 = por %p70, %p71
      %s74 = sadd.s32 %s73, 1
      %p77 = scmp.eq.s32.totalorder %s18, 1
      %p78 = scmp.ne.s32.totalorder %s73, %s75
      %p79 = scmp.eq.s32.totalorder %s18, 0
      %p80 = por %p78, %p79
      %p81 = scmp.ne.s32.totalorder %s73, %s75
      %p82 = scmp.eq.s32.totalorder %s23, 1
      %p83 = por %p81, %p82
      %p84 = scmp.ne.s32.totalorder %s75, %s76
      %p85 = scmp.eq.s32.totalorder %s23, 0
      %p86 = por %p84, %p85
      %p87 = scmp.ne.s32.totalorder %s75, %s76
      %p88 = scmp.eq.s32.totalorder %s24, 1
      %p89 = por %p87, %p88
      %p91 = scmp.ne.s32.totalorder %s76, %s90
      %p92 = scmp.eq.s32.totalorder %s24, 0
      %p93 = por %p91, %p92
      %s95 = sadd.s32 %s94, 1
      %p98 = scmp.eq.s32.totalorder %s18, 1
      %p99 = scmp.ne.s32.totalorder %s94, %s96
      %p100 = scmp.eq.s32.totalorder %s18, 0
      %p101 = por %p99, %p100
      %p102 = scmp.ne.s32.totalorder %s94, %s96
      %p103 = scmp.eq.s32.totalorder %s23, 1
      %p104 = por %p102, %p103
      %p105 = scmp.ne.s32.totalorder %s96, %s97
      %p106 = scmp.eq.s32.totalorder %s23, 0
      %p107 = por %p105, %p106
      %p108 = scmp.ne.s32.totalorder %s96, %s97
      %p109 = scmp.eq.s32.totalorder %s24, 1
      %p110 = por %p108, %p109
      %p112 = scmp.ne.s32.totalorder %s97, %s111
      %p113 = scmp.eq.s32.totalorder %s24, 0
      %p114 = por %p112, %p113
      %s116 = sadd.s32 %s115, 1
      %p119 = scmp.eq.s32.totalorder %s18, 1
      %p120 = scmp.ne.s32.totalorder %s115, %s117
      %p121 = scmp.eq.s32.totalorder %s18, 0
      %p122 = por %p120, %p121
      %p123 = scmp.ne.s32.totalorder %s115, %s117
      %p124 = scmp.eq.s32.totalorder %s23, 1
      %p125 = por %p123, %p124
      %p126 = scmp.ne.s32.totalorder %s117, %s118
      %p127 = scmp.eq.s32.totalorder %s23, 0
      %p128 = por %p126, %p127
      %p129 = scmp.ne.s32.totalorder %s117, %s118
      %p130 = scmp.eq.s32.totalorder %s24, 1
      %p131 = por %p129, %p130
      %p133 = scmp.ne.s32.totalorder %s118, %s132
      %p134 = scmp.eq.s32.totalorder %s24, 0
      %p135 = por %p133, %p134
      %s137 = sadd.s32 %s136, 1
      %p140 = scmp.eq.s32.totalorder %s18, 1
      %p141 = scmp.ne.s32.totalorder %s136, %s138
      %p142 = scmp.eq.s32.totalorder %s18, 0
      %p143 = por %p141, %p142
      %p144 = scmp.ne.s32.totalorder %s136, %s138
      %p145 = scmp.eq.s32.totalorder %s23, 1
      %p146 = por %p144, %p145
      %p147 = scmp.ne.s32.totalorder %s138, %s139
      %p148 = scmp.eq.s32.totalorder %s23, 0
      %p149 = por %p147, %p148
      %p150 = scmp.ne.s32.totalorder %s138, %s139
      %p151 = scmp.eq.s32.totalorder %s24, 1
      %p152 = por %p150, %p151
      %p154 = scmp.ne.s32.totalorder %s139, %s153
      %p155 = scmp.eq.s32.totalorder %s24, 0
      %p156 = por %p154, %p155
      %s158 = sadd.s32 %s157, 1
      %p161 = scmp.eq.s32.totalorder %s18, 1
      %p162 = scmp.ne.s32.totalorder %s157, %s159
      %p163 = scmp.eq.s32.totalorder %s18, 0
      %p164 = por %p162, %p163
      %p165 = scmp.ne.s32.totalorder %s157, %s159
      %p166 = scmp.eq.s32.totalorder %s23, 1
      %p167 = por %p165, %p166
      %p168 = scmp.ne.s32.totalorder %s159, %s160
      %p169 = scmp.eq.s32.totalorder %s23, 0
      %p170 = por %p168, %p169
      %p171 = scmp.ne.s32.totalorder %s159, %s160
      %p172 = scmp.eq.s32.totalorder %s24, 1
      %p173 = por %p171, %p172
      %p175 = scmp.ne.s32.totalorder %s160, %s174
      %p176 = scmp.eq.s32.totalorder %s24, 0
      %p177 = por %p175, %p176
      %s179 = sadd.s32 %s178, 1
      %p182 = scmp.eq.s32.totalorder %s18, 1
      %p183 = scmp.ne.s32.totalorder %s178, %s180
      %p184 = scmp.eq.s32.totalorder %s18, 0
      %p185 = por %p183, %p184
      %p186 = scmp.ne.s32.totalorder %s178, %s180
      %p187 = scmp.eq.s32.totalorder %s23, 1
      %p188 = por %p186, %p187
      %p189 = scmp.ne.s32.totalorder %s180, %s181
      %p190 = scmp.eq.s32.totalorder %s23, 0
      %p191 = por %p189, %p190
      %p192 = scmp.ne.s32.totalorder %s180, %s181
      %p193 = scmp.eq.s32.totalorder %s24, 1
      %p194 = por %p192, %p193
      %p196 = scmp.ne.s32.totalorder %s181, %s195
      %p197 = scmp.eq.s32.totalorder %s24, 0
      %p198 = por %p196, %p197
      %s200 = sadd.s32 %s199, 1
      %p203 = scmp.eq.s32.totalorder %s18, 1
      %p204 = scmp.ne.s32.totalorder %s199, %s201
      %p205 = scmp.eq.s32.totalorder %s18, 0
      %p206 = por %p204, %p205
      %p207 = scmp.ne.s32.totalorder %s199, %s201
      %p208 = scmp.eq.s32.totalorder %s23, 1
      %p209 = por %p207, %p208
      %p210 = scmp.ne.s32.totalorder %s201, %s202
      %p211 = scmp.eq.s32.totalorder %s23, 0
      %p212 = por %p210, %p211
      %p213 = scmp.ne.s32.totalorder %s201, %s202
      %p214 = scmp.eq.s32.totalorder %s24, 1
      %p215 = por %p213, %p214
      %p217 = scmp.ne.s32.totalorder %s202, %s216
      %p218 = scmp.eq.s32.totalorder %s24, 0
      %p219 = por %p217, %p218
      %s220 = ssub.s32 %s18, %s25
      %p221 = scmp.eq.s32.totalorder %s220, 0
      %s223 = sadd.s32 %s222, 1
      %s224 = scalar_select %p221, %s222, %s223
      %p227 = pneg %p221
      %p228 = scmp.eq.s32.totalorder %s18, 1
      %p229 = por %p227, %p228
      %p230 = scmp.ne.s32.totalorder %s222, %s225
      %p231 = scmp.eq.s32.totalorder %s18, 0
      %p232 = por %p230, %p231
      %p233 = scmp.ne.s32.totalorder %s222, %s225
      %p234 = scmp.eq.s32.totalorder %s23, 1
      %p235 = por %p233, %p234
      %p236 = scmp.ne.s32.totalorder %s225, %s226
      %p237 = scmp.eq.s32.totalorder %s23, 0
      %p238 = por %p236, %p237
      %p239 = scmp.ne.s32.totalorder %s225, %s226
      %p240 = scmp.eq.s32.totalorder %s24, 1
      %p241 = por %p239, %p240
      %p243 = scmp.ne.s32.totalorder %s226, %s242
      %p244 = scmp.eq.s32.totalorder %s24, 0
      %p245 = por %p243, %p244
      %p246 = scmp.le.s32.totalorder 1, %s18
      %p247 = scmp.lt.s32.totalorder %s18, 3
      %p248 = pnand %p246, %p247
      %p249 = pneg %p248
      // Predicated region
      $region9: #{conv_autoencoder_forward.1} parent=5 // pred_check
        _
      $region10: #{conv_autoencoder_forward.1} parent=5 // pred_check_branch
        %251 = sbr.rel (%p248) target = $region12
      $region11: #{conv_autoencoder_forward.1} parent=5 // pred_region
        %s252 = ssub.s32 %s18, 1
        // Predicated region
        $region13: #{conv_autoencoder_forward.1} parent=11 // pred_check
          %p253 = pneg %p65
        $region14: #{conv_autoencoder_forward.1} parent=11 // pred_check_branch
          %255 = sbr.rel (%p253) target = $region16
        $region15: #{conv_autoencoder_forward.1} parent=11 // pred_region
          _
        $region16: #{conv_autoencoder_forward.1} parent=11 // pred_fallthru
          _
        // Predicated region
        $region17: #{conv_autoencoder_forward.1} parent=11 // pred_check
          %p256 = pneg %p86
        $region18: #{conv_autoencoder_forward.1} parent=11 // pred_check_branch
          %258 = sbr.rel (%p256) target = $region20
        $region19: #{conv_autoencoder_forward.1} parent=11 // pred_region
          _
        $region20: #{conv_autoencoder_forward.1} parent=11 // pred_fallthru
          _
        // Predicated region
        $region21: #{conv_autoencoder_forward.1} parent=11 // pred_check
          %p259 = pneg %p107
        $region22: #{conv_autoencoder_forward.1} parent=11 // pred_check_branch
          %261 = sbr.rel (%p259) target = $region24
        $region23: #{conv_autoencoder_forward.1} parent=11 // pred_region
          _
        $region24: #{conv_autoencoder_forward.1} parent=11 // pred_fallthru
          _
        // Predicated region
        $region25: #{conv_autoencoder_forward.1} parent=11 // pred_check
          %p262 = pneg %p128
        $region26: #{conv_autoencoder_forward.1} parent=11 // pred_check_branch
          %264 = sbr.rel (%p262) target = $region28
        $region27: #{conv_autoencoder_forward.1} parent=11 // pred_region
          _
        $region28: #{conv_autoencoder_forward.1} parent=11 // pred_fallthru
          _
        // Predicated region
        $region29: #{conv_autoencoder_forward.1} parent=11 // pred_check
          %p265 = pneg %p149
        $region30: #{conv_autoencoder_forward.1} parent=11 // pred_check_branch
          %267 = sbr.rel (%p265) target = $region32
        $region31: #{conv_autoencoder_forward.1} parent=11 // pred_region
          _
        $region32: #{conv_autoencoder_forward.1} parent=11 // pred_fallthru
          _
        // Predicated region
        $region33: #{conv_autoencoder_forward.1} parent=11 // pred_check
          %p268 = pneg %p170
        $region34: #{conv_autoencoder_forward.1} parent=11 // pred_check_branch
          %270 = sbr.rel (%p268) target = $region36
        $region35: #{conv_autoencoder_forward.1} parent=11 // pred_region
          _
        $region36: #{conv_autoencoder_forward.1} parent=11 // pred_fallthru
          _
        // Predicated region
        $region37: #{conv_autoencoder_forward.1} parent=11 // pred_check
          %p271 = pneg %p191
        $region38: #{conv_autoencoder_forward.1} parent=11 // pred_check_branch
          %273 = sbr.rel (%p271) target = $region40
        $region39: #{conv_autoencoder_forward.1} parent=11 // pred_region
          _
        $region40: #{conv_autoencoder_forward.1} parent=11 // pred_fallthru
          _
        // Predicated region
        $region41: #{conv_autoencoder_forward.1} parent=11 // pred_check
          %p274 = pneg %p212
        $region42: #{conv_autoencoder_forward.1} parent=11 // pred_check_branch
          %276 = sbr.rel (%p274) target = $region44
        $region43: #{conv_autoencoder_forward.1} parent=11 // pred_region
          _
        $region44: #{conv_autoencoder_forward.1} parent=11 // pred_fallthru
          _
      $region12: #{conv_autoencoder_forward.1} parent=5 // pred_fallthru
        _
      %p277 = scmp.lt.s32.totalorder %s18, 2
      // Predicated region
      $region45: #{conv_autoencoder_forward.1} parent=5 // pred_check
        %p278 = pneg %p277
      $region46: #{conv_autoencoder_forward.1} parent=5 // pred_check_branch
        %280 = sbr.rel (%p278) target = $region48
      $region47: #{conv_autoencoder_forward.1} parent=5 // pred_region
        // Predicated region
        $region49: #{conv_autoencoder_forward.1} parent=47 // pred_check
          %p281 = pneg %p38
        $region50: #{conv_autoencoder_forward.1} parent=47 // pred_check_branch
          %283 = sbr.rel (%p281) target = $region52
        $region51: #{conv_autoencoder_forward.1} parent=47 // pred_region
          %p284 = scmp.lt.s32.totalorder %s18, 1
          %s285 = scalar_select %p284, %s18, 1
          %s286 = smul.addr %s285, 4
          %s287 = scalar_lea.vmem %s0, %s286
        $region52: #{conv_autoencoder_forward.1} parent=47 // pred_fallthru
          _
      $region48: #{conv_autoencoder_forward.1} parent=5 // pred_fallthru
        _
      %p288 = scmp.le.s32.totalorder 1, %s18
      %p289 = scmp.lt.s32.totalorder %s18, 3
      %p290 = pnand %p288, %p289
      %p291 = pneg %p290
      // Predicated region
      $region53: #{conv_autoencoder_forward.1} parent=5 // pred_check
        _
      $region54: #{conv_autoencoder_forward.1} parent=5 // pred_check_branch
        %293 = sbr.rel (%p290) target = $region56
      $region55: #{conv_autoencoder_forward.1} parent=5 // pred_region
        %s294 = ssub.s32 %s18, 1
        %p295 = scmp.lt.s32.totalorder %s23, 1
        %s296 = scalar_select %p295, %s23, 1
        %s297 = smul.addr %s296, 4
        %s298 = scalar_lea.vmem %s0, %s297
        %p299 = pneg %p44
        %p300 = pneg %p41
        %p301 = pneg %p65
        %p302 = pneg %p62
        %p303 = pneg %p86
        %p304 = pneg %p83
        %p305 = pneg %p107
        %p306 = pneg %p104
        %p307 = pneg %p128
        %p308 = pneg %p125
        %p309 = pneg %p149
        %p310 = pneg %p146
        %p311 = pneg %p170
        %p312 = pneg %p167
        %p313 = pneg %p191
        %p314 = pneg %p188
        %p315 = pneg %p212
        %p316 = pneg %p209
        %p317 = pneg %p238
        %p318 = pneg %p235
        %s319 = sand.u32 %s225, 1
        %s320 = scalar_lea.sflag [#allocation3], %s319
        %s321 = sand.u32 %s225, 1
        %s322 = smul.addr %s321, 4
        %s323 = scalar_lea.vmem [#allocation2], %s322
        %p324 = scmp.lt.s32.totalorder %s23, 1
        %s325 = scalar_select %p324, %s23, 1
        %s326 = smul.addr %s325, 4
        %s327 = scalar_lea.vmem %s0, %s326
        %v328 = vld [vmem:[%s327] sm:$0xf]
        %v329 = vlaneseq
        %v330 = vand.u32 %v329, 127
        %vm331 = vcmp.ge.s32.totalorder %v330, 1
        %vm332 = vcmp.lt.s32.totalorder %v330, 127
        %vm333 = vcmp.ge.s32.totalorder %v330, 2
        %vm334 = vcmp.lt.s32.totalorder %v330, 126
        %vm335 = vcmp.lt.s32.totalorder %v330, 0
        %v336 = vsub.s32 0, %v330
        %v337 = vsel %vm335, %v336, %v330
        %v338 = vshrl.u32 %v337, 1
        %v339 = vand.u32 %v337, 1
        %v340 = vsub.s32 0, %v339
        %v341 = vsel %vm335, %v340, %v339
        %vm342 = vcmp.ne.s32.totalorder %v341, 0
        %vm343 = vcmp.lt.s32.totalorder %v341, 0
        %vm344 = vmand %vm343, %vm342
        %v345 = vadd.s32 %v341, 2
        %v346 = vsel %vm344, %v345, %v341
        %vm347 = vcmp.eq.s32.totalorder %v346, 0
        %vm348 = vcmp.lt.s32.totalorder %v330, 0
        %v349 = vsub.s32 0, %v330
        %v350 = vsel %vm348, %v349, %v330
        %v351 = vshrl.u32 %v350, 2
        %v352 = vand.u32 %v350, 3
        %v353 = vsub.s32 0, %v352
        %v354 = vsel %vm348, %v353, %v352
        %vm355 = vcmp.ne.s32.totalorder %v354, 0
        %vm356 = vcmp.lt.s32.totalorder %v354, 0
        %vm357 = vmand %vm356, %vm355
        %v358 = vadd.s32 %v354, 4
        %v359 = vsel %vm357, %v358, %v354
        %vm360 = vcmp.eq.s32.totalorder %v359, 0
        %v361 = vld [vmem:[%s1] sm:$0xff]
        %v362 = vld [vmem:[%s1 + $0x8] sm:$0xff]
        %363 = vrot.lane.b32.xlu0 %v328, 1
        %v364 = vpop.permute.xlu0 %363
        %v365 = vsel %vm331, 1, 0
        %vm366 = vcmp.eq.s32.totalorder %v365, 1
        %v367 = vsel %vm366, %v364, 0.0
        %s368 = scalar_lea.vmem %s1, 16
        %v369 = vld [vmem:[%s368] sm:$0xff]
        %v370 = vld [vmem:[%s368 + $0x8] sm:$0xff]
        %vm371 = vcmask 31744
        %v373 = vsel %vm371, %v369, 0
        %v376 = vsel %vm371, %v370, 0
        %vm378 = vcmask 1043456
        %v380 = vsel %vm378, %v328, 0
        %382 = vmatpush.msra.mxu0 0.0
        %383 = vmatpush.msra.mxu0 0.0
        %384 = vmatpush.msra.mxu0 0.0
        %385 = vmatpush.msra.mxu0 0.0
        %386 = vmatpush.msra.mxu0 0.0
        %387 = vmatpush.msra.mxu0 0.0
        %388 = vmatpush.msra.mxu0 0.0
        %389 = vmatpush.msra.mxu0 0.0
        %390 = vmatpush.msra.mxu0 0.0
        %391 = vmatpush.msra.mxu0 0.0
        %392 = vmatpush.msra.mxu0 0.0
        %393 = vmatpush.msra.mxu0 0.0
        %394 = vmatpush.msra.mxu0 0.0
        %395 = vmatpush.msra.mxu0 0.0
        %396 = vmatpush.msra.mxu0 0.0
        %397 = vmatpush.msra.mxu0 %v380
        %398 = vmatmul.f32.gmra.mxu0 %v373
        %v399 = vpop.f32.mrf.mxu0
        %v400 = vadd.f32 0.0, %v399
        %401 = vmatmul.f32.gmra.mxu0 %v376
        %v402 = vpop.f32.mrf.mxu0
        %v403 = vadd.f32 0.0, %v402
        %404 = vdwg.mxu0
        %v406 = vsel %vm371, %v361, 0
        %v409 = vsel %vm371, %v362, 0
        %v412 = vsel %vm378, %v367, 0
        %414 = vmatpush.msra.mxu0 0.0
        %415 = vmatpush.msra.mxu0 0.0
        %416 = vmatpush.msra.mxu0 0.0
        %417 = vmatpush.msra.mxu0 0.0
        %418 = vmatpush.msra.mxu0 0.0
        %419 = vmatpush.msra.mxu0 0.0
        %420 = vmatpush.msra.mxu0 0.0
        %421 = vmatpush.msra.mxu0 0.0
        %422 = vmatpush.msra.mxu0 0.0
        %423 = vmatpush.msra.mxu0 0.0
        %424 = vmatpush.msra.mxu0 0.0
        %425 = vmatpush.msra.mxu0 0.0
        %426 = vmatpush.msra.mxu0 0.0
        %427 = vmatpush.msra.mxu0 0.0
        %428 = vmatpush.msra.mxu0 0.0
        %429 = vmatpush.msra.mxu0 %v412
        %430 = vmatmul.f32.gmra.mxu0 %v406
        %v431 = vpop.f32.mrf.mxu0
        %v432 = vadd.f32 %v400, %v431
        %433 = vmatmul.f32.gmra.mxu0 %v409
        %v434 = vpop.f32.mrf.mxu0
        %v435 = vadd.f32 %v403, %v434
        %436 = vdwg.mxu0
        %s437 = scalar_lea.vmem %s1, 32
        %v438 = vld [vmem:[%s437] sm:$0xff]
        %v439 = vld [vmem:[%s437 + $0x8] sm:$0xff]
        %440 = vrot.lane.b32.xlu0 %v328, 127
        %v441 = vpop.permute.xlu0 %440
        %v442 = vsel %vm332, 1, 0
        %vm443 = vcmp.eq.s32.totalorder %v442, 1
        %v444 = vsel %vm443, %v441, 0.0
        %v446 = vsel %vm371, %v438, 0
        %v449 = vsel %vm371, %v439, 0
        %v452 = vsel %vm378, %v444, 0
        %454 = vmatpush.msra.mxu0 0.0
        %455 = vmatpush.msra.mxu0 0.0
        %456 = vmatpush.msra.mxu0 0.0
        %457 = vmatpush.msra.mxu0 0.0
        %458 = vmatpush.msra.mxu0 0.0
        %459 = vmatpush.msra.mxu0 0.0
        %460 = vmatpush.msra.mxu0 0.0
        %461 = vmatpush.msra.mxu0 0.0
        %462 = vmatpush.msra.mxu0 0.0
        %463 = vmatpush.msra.mxu0 0.0
        %464 = vmatpush.msra.mxu0 0.0
        %465 = vmatpush.msra.mxu0 0.0
        %466 = vmatpush.msra.mxu0 0.0
        %467 = vmatpush.msra.mxu0 0.0
        %468 = vmatpush.msra.mxu0 0.0
        %469 = vmatpush.msra.mxu0 %v452
        %470 = vmatmul.f32.gmra.mxu0 %v446
        %v471 = vpop.f32.mrf.mxu0
        %v472 = vadd.f32 0.0, %v471
        %473 = vmatmul.f32.gmra.mxu0 %v449
        %v474 = vpop.f32.mrf.mxu0
        %v475 = vadd.f32 0.0, %v474
        %476 = vdwg.mxu0
        %v477 = vadd.f32 %v432, %v472
        %v478 = vadd.f32 %v435, %v475
        %v479 = vld [vmem:[%s2] sm:$0xff]
        %v480 = vld [vmem:[%s2 + $0x8] sm:$0xff]
        %482 = vset.pattern.permute.xlu0 0
        %483 = vperm.xlu0 %482, %v479
        %v484 = vpop.permute.xlu0 %483
        %487 = vset.pattern.permute.xlu0 0
        %488 = vperm.xlu0 %487, %v480
        %v489 = vpop.permute.xlu0 %488
        %v491 = vadd.f32 %v477, %v484
        %v492 = vadd.f32 %v478, %v489
        %v493 = vmax.f32 %v491, 0.0
        %v494 = vmax.f32 %v492, 0.0
        %495 = vrot.lane.b32.xlu0 %v493, 127
        %v496 = vpop.permute.xlu0 %495
        %497 = vrot.lane.b32.xlu0 %v494, 127
        %v498 = vpop.permute.xlu0 %497
        %v499 = vmax.f32 %v493, %v496
        %v500 = vmax.f32 %v494, %v498
        %v501 = vld [vmem:[%s3] sm:$0xf]
        %502 = vrot.lane.b32.xlu0 %v499, 2
        %v503 = vpop.permute.xlu0 %502
        %504 = vrot.lane.b32.xlu0 %v500, 2
        %v505 = vpop.permute.xlu0 %504
        %v506 = vsel %vm333, 1, 0
        %vm507 = vcmp.eq.s32.totalorder %v506, 1
        %v508 = vsel %vm507, %v503, 0.0
        %v509 = vsel %vm507, %v505, 0.0
        %s510 = scalar_lea.vmem %s3, 4
        %v511 = vld [vmem:[%s510] sm:$0xf]
        %vm512 = vcmask 130048
        %v514 = vsel %vm512, %v511, 0
        %516 = vmatpush.msra.mxu0 0.0
        %517 = vmatpush.msra.mxu0 0.0
        %518 = vmatpush.msra.mxu0 0.0
        %519 = vmatpush.msra.mxu0 0.0
        %520 = vmatpush.msra.mxu0 0.0
        %521 = vmatpush.msra.mxu0 0.0
        %522 = vmatpush.msra.mxu0 0.0
        %523 = vmatpush.msra.mxu0 0.0
        %524 = vmatpush.msra.mxu0 0.0
        %525 = vmatpush.msra.mxu0 0.0
        %526 = vmatpush.msra.mxu0 0.0
        %527 = vmatpush.msra.mxu0 0.0
        %528 = vmatpush.msra.mxu0 0.0
        %529 = vmatpush.msra.mxu0 0.0
        %530 = vmatpush.msra.mxu0 %v500
        %531 = vmatpush.msra.mxu0 %v499
        %532 = vmatmul.f32.gmra.mxu0 %v514
        %v533 = vpop.f32.mrf.mxu0
        %v534 = vadd.f32 0.0, %v533
        %535 = vdwg.mxu0
        %v537 = vsel %vm512, %v501, 0
        %539 = vmatpush.msra.mxu0 0.0
        %540 = vmatpush.msra.mxu0 0.0
        %541 = vmatpush.msra.mxu0 0.0
        %542 = vmatpush.msra.mxu0 0.0
        %543 = vmatpush.msra.mxu0 0.0
        %544 = vmatpush.msra.mxu0 0.0
        %545 = vmatpush.msra.mxu0 0.0
        %546 = vmatpush.msra.mxu0 0.0
        %547 = vmatpush.msra.mxu0 0.0
        %548 = vmatpush.msra.mxu0 0.0
        %549 = vmatpush.msra.mxu0 0.0
        %550 = vmatpush.msra.mxu0 0.0
        %551 = vmatpush.msra.mxu0 0.0
        %552 = vmatpush.msra.mxu0 0.0
        %553 = vmatpush.msra.mxu0 %v509
        %554 = vmatpush.msra.mxu0 %v508
        %555 = vmatmul.f32.gmra.mxu0 %v537
        %v556 = vpop.f32.mrf.mxu0
        %v557 = vadd.f32 %v534, %v556
        %558 = vdwg.mxu0
        %s559 = scalar_lea.vmem %s3, 8
        %v560 = vld [vmem:[%s559] sm:$0xf]
        %561 = vrot.lane.b32.xlu0 %v499, 126
        %v562 = vpop.permute.xlu0 %561
        %563 = vrot.lane.b32.xlu0 %v500, 126
        %v564 = vpop.permute.xlu0 %563
        %v565 = vsel %vm334, 1, 0
        %vm566 = vcmp.eq.s32.totalorder %v565, 1
        %v567 = vsel %vm566, %v562, 0.0
        %v568 = vsel %vm566, %v564, 0.0
        %v570 = vsel %vm512, %v560, 0
        %572 = vmatpush.msra.mxu0 0.0
        %573 = vmatpush.msra.mxu0 0.0
        %574 = vmatpush.msra.mxu0 0.0
        %575 = vmatpush.msra.mxu0 0.0
        %576 = vmatpush.msra.mxu0 0.0
        %577 = vmatpush.msra.mxu0 0.0
        %578 = vmatpush.msra.mxu0 0.0
        %579 = vmatpush.msra.mxu0 0.0
        %580 = vmatpush.msra.mxu0 0.0
        %581 = vmatpush.msra.mxu0 0.0
        %582 = vmatpush.msra.mxu0 0.0
        %583 = vmatpush.msra.mxu0 0.0
        %584 = vmatpush.msra.mxu0 0.0
        %585 = vmatpush.msra.mxu0 0.0
        %586 = vmatpush.msra.mxu0 %v568
        %587 = vmatpush.msra.mxu0 %v567
        %588 = vmatmul.f32.gmra.mxu0 %v570
        %v589 = vpop.f32.mrf.mxu0
        %v590 = vadd.f32 0.0, %v589
        %591 = vdwg.mxu0
        %v592 = vadd.f32 %v557, %v590
        %v593 = vld [vmem:[%s4] sm:$0xf]
        %595 = vset.pattern.permute.xlu0 0
        %596 = vperm.xlu0 %595, %v593
        %v597 = vpop.permute.xlu0 %596
        %v599 = vadd.f32 %v592, %v597
        %v600 = vmax.f32 %v599, 0.0
        %601 = vrot.lane.b32.xlu0 %v600, 126
        %v602 = vpop.permute.xlu0 %601
        %v603 = vmax.f32 %v600, %v602
        %v604 = vld [vmem:[%s5] sm:$0xff]
        %v605 = vld [vmem:[%s5 + $0x8] sm:$0xff]
        %v606 = vld [vmem:[%s5 + $0x10] sm:$0xff]
        %v607 = vld [vmem:[%s5 + $0x18] sm:$0xff]
        %v609 = vsel %vm371, %v604, 0
        %v612 = vsel %vm371, %v605, 0
        %v615 = vsel %vm371, %v606, 0
        %v618 = vsel %vm371, %v607, 0
        %v621 = vsel %vm378, %v603, 0
        %623 = vmatpush.msra.mxu0 0.0
        %624 = vmatpush.msra.mxu0 0.0
        %625 = vmatpush.msra.mxu0 0.0
        %626 = vmatpush.msra.mxu0 0.0
        %627 = vmatpush.msra.mxu0 0.0
        %628 = vmatpush.msra.mxu0 0.0
        %629 = vmatpush.msra.mxu0 0.0
        %630 = vmatpush.msra.mxu0 0.0
        %631 = vmatpush.msra.mxu0 0.0
        %632 = vmatpush.msra.mxu0 0.0
        %633 = vmatpush.msra.mxu0 0.0
        %634 = vmatpush.msra.mxu0 0.0
        %635 = vmatpush.msra.mxu0 0.0
        %636 = vmatpush.msra.mxu0 0.0
        %637 = vmatpush.msra.mxu0 0.0
        %638 = vmatpush.msra.mxu0 %v621
        %639 = vmatmul.f32.gmra.mxu0 %v609
        %v640 = vpop.f32.mrf.mxu0
        %v641 = vadd.f32 0.0, %v640
        %642 = vmatmul.f32.gmra.mxu0 %v612
        %v643 = vpop.f32.mrf.mxu0
        %v644 = vadd.f32 0.0, %v643
        %645 = vmatmul.f32.gmra.mxu0 %v615
        %v646 = vpop.f32.mrf.mxu0
        %v647 = vadd.f32 0.0, %v646
        %648 = vmatmul.f32.gmra.mxu0 %v618
        %v649 = vpop.f32.mrf.mxu0
        %v650 = vadd.f32 0.0, %v649
        %651 = vdwg.mxu0
        %v652 = vld [vmem:[%s6] sm:$0xff]
        %v653 = vld [vmem:[%s6 + $0x8] sm:$0xff]
        %655 = vset.pattern.permute.xlu0 0
        %656 = vperm.xlu0 %655, %v652
        %v657 = vpop.permute.xlu0 %656
        %660 = vset.pattern.permute.xlu0 0
        %661 = vperm.xlu0 %660, %v653
        %v662 = vpop.permute.xlu0 %661
        %v664 = vadd.f32 %v641, %v657
        %v665 = vadd.f32 %v644, %v662
        %v666 = vmax.f32 %v664, 0.0
        %v667 = vmax.f32 %v665, 0.0
        %v668 = vadd.f32 %v647, %v657
        %v669 = vadd.f32 %v650, %v662
        %v670 = vmax.f32 %v668, 0.0
        %v671 = vmax.f32 %v669, 0.0
        %672 = vrot.lane.b32.xlu0 %v670, 2
        %v673 = vpop.permute.xlu0 %672
        %674 = vrot.lane.b32.xlu0 %v671, 2
        %v675 = vpop.permute.xlu0 %674
        %v676 = vsel %vm360, 1, 0
        %vm677 = vcmp.eq.s32.totalorder %v676, 1
        %v678 = vsel %vm677, %v666, %v673
        %v679 = vsel %vm677, %v667, %v675
        %v680 = vld [vmem:[%s7] sm:$0xff]
        %v681 = vld [vmem:[%s7 + $0x8] sm:$0xff]
        %v683 = vsel %vm512, %v680, 0
        %v686 = vsel %vm512, %v681, 0
        %688 = vmatpush.msra.mxu0 0.0
        %689 = vmatpush.msra.mxu0 0.0
        %690 = vmatpush.msra.mxu0 0.0
        %691 = vmatpush.msra.mxu0 0.0
        %692 = vmatpush.msra.mxu0 0.0
        %693 = vmatpush.msra.mxu0 0.0
        %694 = vmatpush.msra.mxu0 0.0
        %695 = vmatpush.msra.mxu0 0.0
        %696 = vmatpush.msra.mxu0 0.0
        %697 = vmatpush.msra.mxu0 0.0
        %698 = vmatpush.msra.mxu0 0.0
        %699 = vmatpush.msra.mxu0 0.0
        %700 = vmatpush.msra.mxu0 0.0
        %701 = vmatpush.msra.mxu0 0.0
        %702 = vmatpush.msra.mxu0 %v679
        %703 = vmatpush.msra.mxu0 %v678
        %704 = vmatmul.f32.gmra.mxu0 %v683
        %v705 = vpop.f32.mrf.mxu0
        %v706 = vadd.f32 0.0, %v705
        %707 = vmatmul.f32.gmra.mxu0 %v686
        %v708 = vpop.f32.mrf.mxu0
        %v709 = vadd.f32 0.0, %v708
        %710 = vdwg.mxu0
        %v711 = vld [vmem:[%s8] sm:$0xf]
        %713 = vset.pattern.permute.xlu0 0
        %714 = vperm.xlu0 %713, %v711
        %v715 = vpop.permute.xlu0 %714
        %v717 = vadd.f32 %v706, %v715
        %v718 = vadd.f32 %v709, %v715
        %719 = vrot.lane.b32.xlu0 %v718, 1
        %v720 = vpop.permute.xlu0 %719
        %v721 = vsel %vm347, 1, 0
        %vm722 = vcmp.eq.s32.totalorder %v721, 1
        %v723 = vsel %vm722, %v717, %v720
        %v724 = vsub.f32 0.0, %v723
        %v725 = vmul.f32 %v724, 1.442695
        %v726 = vpow.pop %v725
        %v727 = vadd.f32 %v726, 1.0
        %v728 = vrcp.pop %v727
        %729 = vst [vmem:[%s323] sm:$0xf] %v728
        %s730 = sand.u32 %s225, 1
        %s731 = scalar_lea.sflag [#allocation3], %s730
        %s732 = sand.u32 %s225, 1
        %s733 = smul.addr %s732, 4
        %s734 = scalar_lea.vmem [#allocation2], %s733
        // Predicated region
        $region57: #{conv_autoencoder_forward.1} parent=55 // pred_check
          %p735 = pneg %p235
        $region58: #{conv_autoencoder_forward.1} parent=55 // pred_check_branch
          %737 = sbr.rel (%p735) target = $region60
        $region59: #{conv_autoencoder_forward.1} parent=55 // pred_region
          %739 = vsyncadd %s731, 0
          %s740 = smul.addr %s23, 4
          %s741 = scalar_lea.hbm %s9, %s740
          %s743 = sshll.u32 %s734, 4
          %s744 = int_to_ptr.vmem [resolvable:$true] %s743
          %s745 = sshll.u32 %s741, 4
          %s746 = int_to_ptr.hbm [resolvable:$true] %s745
          %748 = dma.vmem_to_hbm [thread:$0]  %s744, 64, %s746, %s731
        $region60: #{conv_autoencoder_forward.1} parent=55 // pred_fallthru
          _
      $region56: #{conv_autoencoder_forward.1} parent=5 // pred_fallthru
        _
      %p749 = scmp.le.s32.totalorder 2, %s18
      // Predicated region
      $region61: #{conv_autoencoder_forward.1} parent=5 // pred_check
        %p750 = pneg %p749
      $region62: #{conv_autoencoder_forward.1} parent=5 // pred_check_branch
        %752 = sbr.rel (%p750) target = $region64
      $region63: #{conv_autoencoder_forward.1} parent=5 // pred_region
        %s753 = ssub.s32 %s18, 2
        // Predicated region
        $region65: #{conv_autoencoder_forward.1} parent=63 // pred_check
          %p754 = pneg %p241
        $region66: #{conv_autoencoder_forward.1} parent=63 // pred_check_branch
          %756 = sbr.rel (%p754) target = $region68
        $region67: #{conv_autoencoder_forward.1} parent=63 // pred_region
          %s757 = sand.u32 %s226, 1
          %s758 = scalar_lea.sflag [#allocation3], %s757
          %s759 = sand.u32 %s226, 1
          %s760 = smul.addr %s759, 4
          %s761 = scalar_lea.vmem [#allocation2], %s760
          %763 = dma.done %s758, 64
        $region68: #{conv_autoencoder_forward.1} parent=63 // pred_fallthru
          _
      $region64: #{conv_autoencoder_forward.1} parent=5 // pred_fallthru
        _
    $region6: #{conv_autoencoder_forward.1} parent=1 // loop_footer
      %s22 = sadd.s32 1, %s18
    $region7: #{conv_autoencoder_forward.1} parent=1 // loop_footer_branch
      %17 = sbr.rel target = $region3
    $region8: #{conv_autoencoder_forward.1} parent=1 // loop_exit
      _
    %764 = vsyncpa [#allocation3], 1
    %s765 = scalar_lea.sflag [#allocation3], 1
    %766 = vsyncpa %s765, 1

</llo_original>
